<compile_context>
chip_gen: v7x
topology: tpu7x:2x2x1
jax: 0.10.0
libtpu: 0.0.40
codegen_flags: <defaults>
</compile_context>

<pallas_src>
import functools

import jax
import jax.numpy as jnp
from jax.experimental import pallas as pl
from jax.experimental.pallas import tpu as pltpu


def _cdiv(a, b):
    return -(-a // b)


def _round_up(a, b):
    return _cdiv(a, b) * b


def _dice_partial_kernel(x_ref, t_ref, w_ref, num_ref, den_ref, acc_ref, *,
                         softmax, skip_p_in_den):
    """One grid step = one (batch, hw-split, hw-tile) triple.

    x_ref, t_ref : (1, C, ROW_TILE, 128) native-dtype VMEM tiles
    w_ref        : (C, 1) f32 per-class weights
    num_ref      : (1, 1, 8, 128) weighted sum(p*t) for this (batch, split)
    den_ref      : (1, 1, 8, 128) weighted sum(p+t) (or sum(t)) for (batch, split)
    acc_ref      : (2, C, 128) f32 running per-class / per-lane partial sums
    """
    h = pl.program_id(2)

    @pl.when(h == 0)
    def _():
        acc_ref[...] = jnp.zeros_like(acc_ref)

    x = x_ref[0].astype(jnp.float32)   # (C, ROW_TILE, 128)
    t = t_ref[0].astype(jnp.float32)   # (C, ROW_TILE, 128)

    if softmax:
        # Per-pixel softmax over the leading class axis: pure VPU elementwise
        # across C slabs; the reciprocal goes to the EUP slot (frees VALU).
        m = jnp.max(x, axis=0, keepdims=True)
        e = jnp.exp(x - m)
        s = jnp.sum(e, axis=0, keepdims=True)
        x = e * pl.reciprocal(s, approx=True)

    # Reduce only the sublane (ROW_TILE) axis per tile; keep (C, 128) partials
    # resident so the expensive cross-lane reduce happens once per (n, split).
    acc_ref[0] += jnp.sum(x * t, axis=1)
    if skip_p_in_den:
        # softmax=True + uniform weights: sum_c softmax_c == 1 per real pixel,
        # so the p contribution to the denominator is HW (added in wrapper).
        acc_ref[1] += jnp.sum(t, axis=1)
    else:
        acc_ref[1] += jnp.sum(x + t, axis=1)

    @pl.when(h == pl.num_programs(2) - 1)
    def _():
        w = w_ref[...]                               # (C, 1), broadcasts over lanes
        num_ref[...] = jnp.full(num_ref.shape, jnp.sum(acc_ref[0] * w), jnp.float32)
        den_ref[...] = jnp.full(den_ref.shape, jnp.sum(acc_ref[1] * w), jnp.float32)


def _vmem_budget_and_limit():
    """Generation-gated (input-tile budget incl. 2x double-buffer, vmem limit)."""
    cap = None
    try:
        cap = getattr(pltpu.get_tpu_info(), "vmem_capacity_bytes", None)
    except Exception:
        cap = None
    if cap is not None and cap >= 100 * 1024 * 1024:
        # v5e / v6e: 128 MiB physical VMEM -> big tiles; the scoped default
        # (16/32 MiB) must be raised explicitly.
        return 24 * 1024 * 1024, 64 * 1024 * 1024
    # v7x (64 MiB per TensorCore) or unknown: stay well under the ceiling.
    return 16 * 1024 * 1024, 40 * 1024 * 1024


def mean_dice_score(inputs, targets, weights=None, softmax=True, epsilon=1e-5,
                    tile_budget_bytes=None):
    """inputs, targets: (N, C, H, W), any float dtype. Returns scalar f32."""
    N, C, H, W = inputs.shape
    HW = H * W
    LANE = 128

    uniform_w = weights is None
    if uniform_w:
        w_flat = jnp.ones((C,), jnp.float32)
    else:
        w_flat = jnp.asarray(weights, jnp.float32).reshape(C)
    w = w_flat.reshape(C, 1)
    skip_p_in_den = bool(softmax) and uniform_w

    itemsize_sum = (jnp.dtype(inputs.dtype).itemsize
                    + jnp.dtype(targets.dtype).itemsize)
    sublane_mult = max(8, 32 // jnp.dtype(inputs.dtype).itemsize,
                       32 // jnp.dtype(targets.dtype).itemsize)

    budget_bytes, vmem_limit = _vmem_budget_and_limit()
    if tile_budget_bytes is not None:
        budget_bytes = int(tile_budget_bytes)
    bytes_per_row = C * LANE * itemsize_sum * 2          # x2 for double buffering
    desired_rows = max(sublane_mult, budget_bytes // bytes_per_row)

    # Use both TensorCores (v7x megacore) even for tiny batches by splitting
    # the spatial axis into a second "parallel" grid dimension.  Only worth it
    # when each half gets at least a full sublane-aligned tile of rows.
    n_rows_min = _cdiv(HW, LANE)
    n_split = 2 if (N == 1 and n_rows_min >= 2 * sublane_mult) else 1
    per_split = _cdiv(n_rows_min, n_split)

    if n_split == 1 and per_split <= desired_rows:
        # Single hw step: a full-extent row block is always legal.
        row_tile = per_split
        num_hw = 1
    else:
        row_tile = min((desired_rows // sublane_mult) * sublane_mult,
                       _round_up(per_split, sublane_mult))
        row_tile = max(row_tile, sublane_mult)
        num_hw = _cdiv(per_split, row_tile)
    n_rows = n_split * num_hw * row_tile
    pad = n_rows * LANE - HW

    # Metadata-only reshape + (only when needed) zero pad; NO dtype cast here:
    # stream the native dtype, cast to f32 in-kernel.
    x = inputs.reshape(N, C, HW)
    t = targets.reshape(N, C, HW)
    if pad:
        x = jnp.pad(x, ((0, 0), (0, 0), (0, pad)))
        t = jnp.pad(t, ((0, 0), (0, 0), (0, pad)))
    x = x.reshape(N, C, n_rows, LANE)
    t = t.reshape(N, C, n_rows, LANE)

    kernel = functools.partial(_dice_partial_kernel, softmax=bool(softmax),
                               skip_p_in_den=skip_p_in_den)

    out_sh = jax.ShapeDtypeStruct((N, n_split, 8, 128), jnp.float32)
    num_p, den_p = pl.pallas_call(
        kernel,
        out_shape=(out_sh, out_sh),
        grid_spec=pltpu.PrefetchScalarGridSpec(
            num_scalar_prefetch=0,
            grid=(N, n_split, num_hw),
            in_specs=[
                pl.BlockSpec((1, C, row_tile, LANE),
                             lambda n, s, h: (n, 0, s * num_hw + h, 0)),
                pl.BlockSpec((1, C, row_tile, LANE),
                             lambda n, s, h: (n, 0, s * num_hw + h, 0)),
                pl.BlockSpec((C, 1), lambda n, s, h: (0, 0)),
            ],
            out_specs=(
                pl.BlockSpec((1, 1, 8, 128), lambda n, s, h: (n, s, 0, 0)),
                pl.BlockSpec((1, 1, 8, 128), lambda n, s, h: (n, s, 0, 0)),
            ),
            scratch_shapes=[pltpu.VMEM((2, C, LANE), jnp.float32)],
        ),
        compiler_params=pltpu.CompilerParams(
            # batch + hw-split parallel (megacore), hw tile axis carries acc.
            dimension_semantics=("parallel", "parallel", "arbitrary"),
            vmem_limit_bytes=vmem_limit,
        ),
    )(x, t, w)

    # Combine per-(batch, split) weighted partials; tiny math in the wrapper.
    num = 2.0 * jnp.sum(num_p[:, :, 0, 0], axis=1)           # (N,)
    den = jnp.sum(den_p[:, :, 0, 0], axis=1)                  # (N,)
    if skip_p_in_den:
        den = den + float(HW)    # sum_c softmax_c == 1 per (real) pixel
    elif softmax and pad:
        # Zero-padded pixels under softmax contribute exactly 1/C per class to
        # sum(p); subtract that analytically instead of streaming a mask.
        den = den - (float(pad) / float(C)) * jnp.sum(w_flat)
    den = den + epsilon
    return jnp.mean(num / den)


def _reference(inputs, targets, weights=None, softmax=True, epsilon=1e-5):
    x = inputs.astype(jnp.float32)
    t = targets.astype(jnp.float32)
    if softmax:
        x = jax.nn.softmax(x, axis=1)
    C = x.shape[1]
    if weights is None:
        weights = jnp.ones((C,), jnp.float32)
    w = jnp.asarray(weights, jnp.float32)[None, :, None, None]
    num = 2.0 * jnp.sum(x * t * w, axis=(1, 2, 3))
    den = jnp.sum((x + t) * w, axis=(1, 2, 3)) + epsilon
    return jnp.mean(num / den)


if __name__ == "__main__":
    key = jax.random.PRNGKey(0)
    k1, k2, k3, k4, k5, k6 = jax.random.split(key, 6)

    # 1) Default config: N=2, C=4, 16x16, f32, softmax=True, uniform weights.
    N, C, H, W = 2, 4, 16, 16
    logits = jax.random.normal(k1, (N, C, H, W), dtype=jnp.float32)
    labels = jax.random.randint(k2, (N, H, W), 0, C)
    targets = jax.nn.one_hot(labels, C, axis=1, dtype=jnp.float32)
    out = jax.block_until_ready(mean_dice_score(logits, targets))
    ref = jax.block_until_ready(_reference(logits, targets))
    assert jnp.allclose(out, ref, atol=1e-3, rtol=1e-3), (out, ref)

    # 2) Native bf16 streaming path (halved HBM traffic; f32 math in-kernel).
    out_bf16 = jax.block_until_ready(
        mean_dice_score(logits.astype(jnp.bfloat16), targets.astype(jnp.bfloat16)))
    ref_bf16 = jax.block_until_ready(
        _reference(logits.astype(jnp.bfloat16), targets.astype(jnp.bfloat16)))
    assert jnp.allclose(out_bf16, ref_bf16, atol=2e-3, rtol=2e-3), (out_bf16, ref_bf16)

    # 3) softmax=False with non-uniform class weights (exact path, tight tol).
    probs = jax.nn.softmax(logits, axis=1)
    wts = jnp.array([1.0, 2.0, 0.5, 1.5], jnp.float32)
    out_ns = jax.block_until_ready(
        mean_dice_score(probs, targets, weights=wts, softmax=False))
    ref_ns = jax.block_until_ready(
        _reference(probs, targets, weights=wts, softmax=False))
    assert jnp.allclose(out_ns, ref_ns, atol=1e-5, rtol=1e-5), (out_ns, ref_ns)

    # 4) HW not a multiple of 128 (pad + analytic softmax correction), weighted.
    H2, W2 = 10, 13
    logits2 = jax.random.normal(k3, (N, C, H2, W2), dtype=jnp.float32)
    labels2 = jax.random.randint(k4, (N, H2, W2), 0, C)
    targets2 = jax.nn.one_hot(labels2, C, axis=1, dtype=jnp.float32)
    out_pad = jax.block_until_ready(
        mean_dice_score(logits2, targets2, weights=wts, softmax=True))
    ref_pad = jax.block_until_ready(
        _reference(logits2, targets2, weights=wts, softmax=True))
    assert jnp.allclose(out_pad, ref_pad, atol=5e-3, rtol=5e-3), (out_pad, ref_pad)

    # 5) N=1: spatial axis split across two "parallel" grid slots (v7x megacore).
    H3, W3 = 64, 64
    logits3 = jax.random.normal(k5, (1, C, H3, W3), dtype=jnp.float32)
    labels3 = jax.random.randint(k6, (1, H3, W3), 0, C)
    targets3 = jax.nn.one_hot(labels3, C, axis=1, dtype=jnp.float32)
    out_sp = jax.block_until_ready(mean_dice_score(logits3, targets3))
    ref_sp = jax.block_until_ready(_reference(logits3, targets3))
    assert jnp.allclose(out_sp, ref_sp, atol=1e-3, rtol=1e-3), (out_sp, ref_sp)

    # 6) Tiny tile budget override -> multi-step hw accumulation path.
    logits4 = jnp.concatenate([logits3, logits3 * 0.5], axis=0)
    targets4 = jnp.concatenate([targets3, targets3], axis=0)
    out_ms = jax.block_until_ready(
        mean_dice_score(logits4, targets4, tile_budget_bytes=64 * 1024))
    ref_ms = jax.block_until_ready(_reference(logits4, targets4))
    assert jnp.allclose(out_ms, ref_ms, atol=1e-3, rtol=1e-3), (out_ms, ref_ms)

    print("KERNEL_OK")
</pallas_src>

<mosaic_0001>
module attributes {stable_mosaic.version = 11 : i64} {
  func.func @_dice_partial_kernel(%arg0: i32, %arg1: i32, %arg2: i32, %arg3: memref<1x4x2x128xf32, #tpu.memory_space<vmem>>, %arg4: memref<1x4x2x128xf32, #tpu.memory_space<vmem>>, %arg5: memref<4x1xf32, #tpu.memory_space<vmem>>, %arg6: memref<1x1x8x128xf32, #tpu.memory_space<vmem>>, %arg7: memref<1x1x8x128xf32, #tpu.memory_space<vmem>>, %arg8: memref<2x4x128xf32, #tpu.memory_space<vmem>>) attributes {dimension_semantics = [#tpu.dimension_semantics<parallel>, #tpu.dimension_semantics<parallel>, #tpu.dimension_semantics<arbitrary>], iteration_bounds = array<i64: 2, 1, 1>, scalar_prefetch = 0 : i64, scratch_operands = 1 : i64, tpu.core_type = #tpu.core_type<tc>, window_params = [{transform_indices = @transform_0, window_bounds = array<i64: 1, 4, 2, 128>}, {transform_indices = @transform_1, window_bounds = array<i64: 1, 4, 2, 128>}, {pipeline_mode = #tpu.pipeline_mode<synchronous>, transform_indices = @transform_2, window_bounds = array<i64: 4, 1>}, {transform_indices = @transform_3, window_bounds = array<i64: 1, 1, 8, 128>}, {transform_indices = @transform_4, window_bounds = array<i64: 1, 1, 8, 128>}]} {
    %c0_i32 = arith.constant 0 : i32
    %0 = arith.cmpi eq, %arg2, %c0_i32 : i32
    %1 = arith.extui %0 : i1 to i32
    %c0_i32_0 = arith.constant 0 : i32
    %2 = arith.cmpi ne, %1, %c0_i32_0 : i32
    scf.if %2 {
      %cst_24 = arith.constant 0.000000e+00 : f32
      %35 = vector.broadcast %cst_24 : f32 to vector<2x4x128xf32>
      %c0_25 = arith.constant 0 : index
      %c0_26 = arith.constant 0 : index
      %c0_27 = arith.constant 0 : index
      %36 = vector.load %arg8[%c0_25, %c0_26, %c0_27] : memref<2x4x128xf32, #tpu.memory_space<vmem>>, vector<2x4x128xf32>
      tpu.vector_store %arg8[%c0_25, %c0_26, %c0_27], %35 {strides = array<i32>} : memref<2x4x128xf32, #tpu.memory_space<vmem>>, vector<2x4x128xf32>,
    } else {
    }
    %c0 = arith.constant 0 : index
    %c0_1 = arith.constant 0 : index
    %c0_2 = arith.constant 0 : index
    %c0_3 = arith.constant 0 : index
    %3 = vector.load %arg3[%c0, %c0_1, %c0_2, %c0_3] : memref<1x4x2x128xf32, #tpu.memory_space<vmem>>, vector<1x4x2x128xf32>
    %4 = vector.shape_cast %3 : vector<1x4x2x128xf32> to vector<4x2x128xf32>
    %c0_4 = arith.constant 0 : index
    %c0_5 = arith.constant 0 : index
    %c0_6 = arith.constant 0 : index
    %c0_7 = arith.constant 0 : index
    %5 = vector.load %arg4[%c0_4, %c0_5, %c0_6, %c0_7] : memref<1x4x2x128xf32, #tpu.memory_space<vmem>>, vector<1x4x2x128xf32>
    %6 = vector.shape_cast %5 : vector<1x4x2x128xf32> to vector<4x2x128xf32>
    %cst = arith.constant dense<0xFF800000> : vector<2x128xf32>
    %7 = vector.multi_reduction <maximumf>, %4, %cst [0] : vector<4x2x128xf32> to vector<2x128xf32>
    %8 = vector.shape_cast %7 : vector<2x128xf32> to vector<1x2x128xf32>
    %9 = vector.broadcast %8 : vector<1x2x128xf32> to vector<4x2x128xf32>
    %10 = arith.subf %4, %9 : vector<4x2x128xf32>
    %11 = math.exp %10 : vector<4x2x128xf32>
    %cst_8 = arith.constant dense<0.000000e+00> : vector<2x128xf32>
    %12 = vector.multi_reduction <add>, %11, %cst_8 [0] : vector<4x2x128xf32> to vector<2x128xf32>
    %13 = vector.shape_cast %12 : vector<2x128xf32> to vector<1x2x128xf32>
    %14 = tpu.reciprocal %13 {approx = true} : vector<1x2x128xf32> -> vector<1x2x128xf32>
    %15 = vector.broadcast %14 : vector<1x2x128xf32> to vector<4x2x128xf32>
    %16 = arith.mulf %11, %15 : vector<4x2x128xf32>
    %c0_9 = arith.constant 0 : index
    %c0_10 = arith.constant 0 : index
    %c0_11 = arith.constant 0 : index
    %17 = vector.load %arg8[%c0_9, %c0_10, %c0_11] : memref<2x4x128xf32, #tpu.memory_space<vmem>>, vector<1x4x128xf32>
    %18 = vector.shape_cast %17 : vector<1x4x128xf32> to vector<4x128xf32>
    %19 = arith.mulf %16, %6 : vector<4x2x128xf32>
    %cst_12 = arith.constant dense<0.000000e+00> : vector<4x128xf32>
    %20 = vector.multi_reduction <add>, %19, %cst_12 [1] : vector<4x2x128xf32> to vector<4x128xf32>
    %21 = arith.addf %18, %20 : vector<4x128xf32>
    %c0_13 = arith.constant 0 : index
    %c0_14 = arith.constant 0 : index
    %c0_15 = arith.constant 0 : index
    %22 = vector.load %arg8[%c0_13, %c0_14, %c0_15] : memref<2x4x128xf32, #tpu.memory_space<vmem>>, vector<1x4x128xf32>
    %23 = vector.shape_cast %22 : vector<1x4x128xf32> to vector<4x128xf32>
    %24 = vector.shape_cast %21 : vector<4x128xf32> to vector<1x4x128xf32>
    tpu.vector_store %arg8[%c0_13, %c0_14, %c0_15], %24 {strides = array<i32>} : memref<2x4x128xf32, #tpu.memory_space<vmem>>, vector<1x4x128xf32>,
    %c1 = arith.constant 1 : index
    %c0_16 = arith.constant 0 : index
    %c0_17 = arith.constant 0 : index
    %25 = vector.load %arg8[%c1, %c0_16, %c0_17] : memref<2x4x128xf32, #tpu.memory_space<vmem>>, vector<1x4x128xf32>
    %26 = vector.shape_cast %25 : vector<1x4x128xf32> to vector<4x128xf32>
    %cst_18 = arith.constant dense<0.000000e+00> : vector<4x128xf32>
    %27 = vector.multi_reduction <add>, %6, %cst_18 [1] : vector<4x2x128xf32> to vector<4x128xf32>
    %28 = arith.addf %26, %27 : vector<4x128xf32>
    %c1_19 = arith.constant 1 : index
    %c0_20 = arith.constant 0 : index
    %c0_21 = arith.constant 0 : index
    %29 = vector.load %arg8[%c1_19, %c0_20, %c0_21] : memref<2x4x128xf32, #tpu.memory_space<vmem>>, vector<1x4x128xf32>
    %30 = vector.shape_cast %29 : vector<1x4x128xf32> to vector<4x128xf32>
    %31 = vector.shape_cast %28 : vector<4x128xf32> to vector<1x4x128xf32>
    tpu.vector_store %arg8[%c1_19, %c0_20, %c0_21], %31 {strides = array<i32>} : memref<2x4x128xf32, #tpu.memory_space<vmem>>, vector<1x4x128xf32>,
    %c0_i32_22 = arith.constant 0 : i32
    %32 = arith.cmpi eq, %arg2, %c0_i32_22 : i32
    %33 = arith.extui %32 : i1 to i32
    %c0_i32_23 = arith.constant 0 : i32
    %34 = arith.cmpi ne, %33, %c0_i32_23 : i32
    scf.if %34 {
      %c0_24 = arith.constant 0 : index
      %c0_25 = arith.constant 0 : index
      %35 = vector.load %arg5[%c0_24, %c0_25] : memref<4x1xf32, #tpu.memory_space<vmem>>, vector<4x1xf32>
      %c0_26 = arith.constant 0 : index
      %c0_27 = arith.constant 0 : index
      %c0_28 = arith.constant 0 : index
      %36 = vector.load %arg8[%c0_26, %c0_27, %c0_28] : memref<2x4x128xf32, #tpu.memory_space<vmem>>, vector<1x4x128xf32>
      %37 = vector.shape_cast %36 : vector<1x4x128xf32> to vector<4x128xf32>
      %38 = vector.broadcast %35 : vector<4x1xf32> to vector<4x128xf32>
      %39 = arith.mulf %37, %38 : vector<4x128xf32>
      %40 = vector.shape_cast %39 : vector<4x128xf32> to vector<1x4x128xf32>
      %cst_29 = arith.constant dense<0.000000e+00> : vector<1xf32>
      %41 = vector.multi_reduction <add>, %40, %cst_29 [1, 2] : vector<1x4x128xf32> to vector<1xf32>
      %42 = vector.shape_cast %41 : vector<1xf32> to vector<1x1x1xf32>
      %43 = vector.extract %42[0, 0, 0] : f32 from vector<1x1x1xf32>
      %44 = vector.broadcast %43 : f32 to vector<1x1x8x128xf32>
      %c0_30 = arith.constant 0 : index
      %c0_31 = arith.constant 0 : index
      %c0_32 = arith.constant 0 : index
      %c0_33 = arith.constant 0 : index
      %45 = vector.load %arg6[%c0_30, %c0_31, %c0_32, %c0_33] : memref<1x1x8x128xf32, #tpu.memory_space<vmem>>, vector<1x1x8x128xf32>
      tpu.vector_store %arg6[%c0_30, %c0_31, %c0_32, %c0_33], %44 {strides = array<i32>} : memref<1x1x8x128xf32, #tpu.memory_space<vmem>>, vector<1x1x8x128xf32>,
      %c1_34 = arith.constant 1 : index
      %c0_35 = arith.constant 0 : index
      %c0_36 = arith.constant 0 : index
      %46 = vector.load %arg8[%c1_34, %c0_35, %c0_36] : memref<2x4x128xf32, #tpu.memory_space<vmem>>, vector<1x4x128xf32>
      %47 = vector.shape_cast %46 : vector<1x4x128xf32> to vector<4x128xf32>
      %48 = vector.broadcast %35 : vector<4x1xf32> to vector<4x128xf32>
      %49 = arith.mulf %47, %48 : vector<4x128xf32>
      %50 = vector.shape_cast %49 : vector<4x128xf32> to vector<1x4x128xf32>
      %cst_37 = arith.constant dense<0.000000e+00> : vector<1xf32>
      %51 = vector.multi_reduction <add>, %50, %cst_37 [1, 2] : vector<1x4x128xf32> to vector<1xf32>
      %52 = vector.shape_cast %51 : vector<1xf32> to vector<1x1x1xf32>
      %53 = vector.extract %52[0, 0, 0] : f32 from vector<1x1x1xf32>
      %54 = vector.broadcast %53 : f32 to vector<1x1x8x128xf32>
      %c0_38 = arith.constant 0 : index
      %c0_39 = arith.constant 0 : index
      %c0_40 = arith.constant 0 : index
      %c0_41 = arith.constant 0 : index
      %55 = vector.load %arg7[%c0_38, %c0_39, %c0_40, %c0_41] : memref<1x1x8x128xf32, #tpu.memory_space<vmem>>, vector<1x1x8x128xf32>
      tpu.vector_store %arg7[%c0_38, %c0_39, %c0_40, %c0_41], %54 {strides = array<i32>} : memref<1x1x8x128xf32, #tpu.memory_space<vmem>>, vector<1x1x8x128xf32>,
    } else {
    }
    return
  }
  func.func @transform_0(%arg0: i32, %arg1: i32, %arg2: i32) -> (i32, i32, i32, i32) {
    %c1_i32 = arith.constant 1 : i32
    %0 = arith.muli %arg1, %c1_i32 : i32
    %1 = arith.addi %0, %arg2 : i32
    %c0_i32 = arith.constant 0 : i32
    %c0_i32_0 = arith.constant 0 : i32
    %c0_i32_1 = arith.constant 0 : i32
    return %arg0, %c0_i32, %1, %c0_i32_0 : i32, i32, i32, i32
  }
  func.func @transform_1(%arg0: i32, %arg1: i32, %arg2: i32) -> (i32, i32, i32, i32) {
    %c1_i32 = arith.constant 1 : i32
    %0 = arith.muli %arg1, %c1_i32 : i32
    %1 = arith.addi %0, %arg2 : i32
    %c0_i32 = arith.constant 0 : i32
    %c0_i32_0 = arith.constant 0 : i32
    %c0_i32_1 = arith.constant 0 : i32
    return %arg0, %c0_i32, %1, %c0_i32_0 : i32, i32, i32, i32
  }
  func.func @transform_2(%arg0: i32, %arg1: i32, %arg2: i32) -> (i32, i32) {
    %c0_i32 = arith.constant 0 : i32
    %c0_i32_0 = arith.constant 0 : i32
    %c0_i32_1 = arith.constant 0 : i32
    return %c0_i32, %c0_i32_0 : i32, i32
  }
  func.func @transform_3(%arg0: i32, %arg1: i32, %arg2: i32) -> (i32, i32, i32, i32) {
    %c0_i32 = arith.constant 0 : i32
    %c0_i32_0 = arith.constant 0 : i32
    %c0_i32_1 = arith.constant 0 : i32
    return %arg0, %arg1, %c0_i32, %c0_i32_0 : i32, i32, i32, i32
  }
  func.func @transform_4(%arg0: i32, %arg1: i32, %arg2: i32) -> (i32, i32, i32, i32) {
    %c0_i32 = arith.constant 0 : i32
    %c0_i32_0 = arith.constant 0 : i32
    %c0_i32_1 = arith.constant 0 : i32
    return %arg0, %arg1, %c0_i32, %c0_i32_0 : i32, i32, i32, i32
  }
}

</mosaic_0001>

<llo_original>
// kernel: tpu_custom_call.1
$region0: #{tpu_custom_call.1}
  #allocation0 [shape = 'u32[]', space=smem, size = 0x4, offset = 0x4, fixed_abs, tag = 'smem constant byte address 0x4 - core index']
  #allocation1 [shape = 'u32[144,128]{1,0:T(1,128)}', space=vmem, size = 0x12000, scoped, tag = 'internal scratch']
  #allocation2 [shape = 'f32[2,4,128]{2,1,0:T(4,128)}', space=vmem, size = 0x1000, scoped, tag = 'scratch operand']
  %s0 = inlined_call_operand.hbm [shape: f32[2,4,2,128], index: 0, kind: input, shape index: {}]
  %s1 = inlined_call_operand.hbm [shape: f32[2,4,2,128], index: 1, kind: input, shape index: {}]
  %s2 = inlined_call_operand.vmem [shape: f32[4,1], index: 2, kind: input, shape index: {}]
  %s3 = inlined_call_operand.hbm [shape: f32[2,1,8,128], index: 3, kind: output, shape index: {0}]
  %s4 = inlined_call_operand.hbm [shape: f32[2,1,8,128], index: 4, kind: output, shape index: {1}]
  %5 = xla_tuple %s3, %s4
  %s6 = sld [smem:[#allocation0]]
  $region69: #{tpu_custom_call.1} parent=0
    _
  %s8 = ssub.s32 1, %s6
  %s9 = scalar_select 0, %s8, %s6
  $region1: #{tpu_custom_call.1} parent=0
    #allocation3 [shape = 'u8[8192]{0}', space=vmem, size = 0x2000, scoped, tag = 'input window, operand 0']
    #allocation4 [shape = 's32[2]{0}', space=sflag, size = 0x8, scoped, tag = 'scoped memory for tpu_custom_call.1']
    #allocation5 [shape = 's32[2]{0}', space=sflag, size = 0x8, scoped, tag = 'scoped memory for tpu_custom_call.1']
    #allocation6 [shape = 'u8[8192]{0}', space=vmem, size = 0x2000, scoped, tag = 'input window, operand 1']
    #allocation7 [shape = 's32[2]{0}', space=sflag, size = 0x8, scoped, tag = 'scoped memory for tpu_custom_call.1']
    #allocation8 [shape = 'u8[8192]{0}', space=vmem, size = 0x2000, scoped, tag = 'output window, operand 0']
    #allocation9 [shape = 'u8[8192]{0}', space=vmem, size = 0x2000, scoped, tag = 'output window, operand 1']
    #allocation10 [shape = 's32[2]{0}', space=sflag, size = 0x8, scoped, tag = 'scoped memory for tpu_custom_call.1']
    %10 = vsyncpa [#allocation4], 0
    %s11 = scalar_lea.sflag [#allocation4], 1
    %12 = vsyncpa %s11, 0
    %13 = vsyncpa [#allocation7], 0
    %s14 = scalar_lea.sflag [#allocation7], 1
    %15 = vsyncpa %s14, 0
    %16 = vsyncpa [#allocation5], 0
    %s17 = scalar_lea.sflag [#allocation5], 1
    %18 = vsyncpa %s17, 0
    %19 = vsyncpa [#allocation10], 0
    %s20 = scalar_lea.sflag [#allocation10], 1
    %21 = vsyncpa %s20, 0
    loop: start=0, step=1, limit=4
    $region2: #{tpu_custom_call.1} parent=1 // loop_pre_header
      _
    $region3: #{tpu_custom_call.1} parent=1 // loop_header
      %s23 = sphi 0, %s27
      %p24 = scmp.ge.s32.totalorder %s23, 4
      %s30 = sphi 0, %s49
      %s31 = sphi 0, %s45
      %s32 = sphi 0, %s41
      %s33 = sphi 0, %s30
      %s34 = sphi 0, %s31
      %s35 = sphi 0, %s32
      %s36 = sphi 0, %s33
      %s37 = sphi 0, %s34
      %s38 = sphi 0, %s35
      %s56 = sphi 0, %s58
      %s59 = sphi 0, %s56
      %s60 = sphi 0, %s59
      %s76 = sphi 0, %s60
      %s86 = sphi 0, %s88
      %s89 = sphi 0, %s86
      %s90 = sphi 0, %s89
      %s106 = sphi 0, %s90
      %s110 = sphi 0, %s110
      %s112 = sphi 0, %s110
      %s113 = sphi 0, %s112
      %s127 = sphi 0, %s113
      %s135 = sphi 0, %s137
      %s138 = sphi 0, %s135
      %s139 = sphi 0, %s138
      %s155 = sphi 0, %s139
      %s163 = sphi 0, %s165
      %s166 = sphi 0, %s163
      %s167 = sphi 0, %s166
      %s183 = sphi 0, %s167
    $region4: #{tpu_custom_call.1} parent=1 // loop_header_branch
      %26 = sbr.rel (%p24) target = $region8
    $region5: #{tpu_custom_call.1} parent=1 // loop_body
      %s28 = ssub.s32 %s23, 1
      %s29 = ssub.s32 %s23, 2
      %s39 = sadd.s32 1, %s32
      %p40 = scmp.ge.s32.totalorder %s39, 1
      %s41 = scalar_select %p40, 0, %s39
      %s42 = sadd.s32 1, %s31
      %s43 = scalar_select %p40, %s42, %s31
      %p44 = scmp.ge.s32.totalorder %s43, 1
      %s45 = scalar_select %p44, 0, %s43
      %s46 = sadd.s32 1, %s30
      %s47 = scalar_select %p44, %s46, %s30
      %p48 = scmp.ge.s32.totalorder %s47, 2
      %s49 = scalar_select %p48, 0, %s47
      %s50 = sadd.s32 %s31, %s32
      %s51 = sadd.s32 %s45, %s41
      %s52 = ssub.s32 %s30, %s49
      %s53 = ssub.s32 %s50, %s51
      %s54 = sor.u32 %s52, %s53
      %p55 = scmp.eq.s32.totalorder %s54, 0
      %s57 = sadd.s32 %s56, 1
      %s58 = scalar_select %p55, %s56, %s57
      %p61 = pneg %p55
      %p62 = scmp.eq.s32.totalorder %s23, 1
      %p63 = por %p61, %p62
      %p64 = scmp.ne.s32.totalorder %s56, %s59
      %p65 = scmp.eq.s32.totalorder %s23, 0
      %p66 = por %p64, %p65
      %p67 = scmp.ne.s32.totalorder %s56, %s59
      %p68 = scmp.eq.s32.totalorder %s28, 1
      %p69 = por %p67, %p68
      %p70 = scmp.ne.s32.totalorder %s59, %s60
      %p71 = scmp.eq.s32.totalorder %s28, 0
      %p72 = por %p70, %p71
      %p73 = scmp.ne.s32.totalorder %s59, %s60
      %p74 = scmp.eq.s32.totalorder %s29, 1
      %p75 = por %p73, %p74
      %p77 = scmp.ne.s32.totalorder %s60, %s76
      %p78 = scmp.eq.s32.totalorder %s29, 0
      %p79 = por %p77, %p78
      %s80 = sadd.s32 %s31, %s32
      %s81 = sadd.s32 %s45, %s41
      %s82 = ssub.s32 %s30, %s49
      %s83 = ssub.s32 %s80, %s81
      %s84 = sor.u32 %s82, %s83
      %p85 = scmp.eq.s32.totalorder %s84, 0
      %s87 = sadd.s32 %s86, 1
      %s88 = scalar_select %p85, %s86, %s87
      %p91 = pneg %p85
      %p92 = scmp.eq.s32.totalorder %s23, 1
      %p93 = por %p91, %p92
      %p94 = scmp.ne.s32.totalorder %s86, %s89
      %p95 = scmp.eq.s32.totalorder %s23, 0
      %p96 = por %p94, %p95
      %p97 = scmp.ne.s32.totalorder %s86, %s89
      %p98 = scmp.eq.s32.totalorder %s28, 1
      %p99 = por %p97, %p98
      %p100 = scmp.ne.s32.totalorder %s89, %s90
      %p101 = scmp.eq.s32.totalorder %s28, 0
      %p102 = por %p100, %p101
      %p103 = scmp.ne.s32.totalorder %s89, %s90
      %p104 = scmp.eq.s32.totalorder %s29, 1
      %p105 = por %p103, %p104
      %p107 = scmp.ne.s32.totalorder %s90, %s106
      %p108 = scmp.eq.s32.totalorder %s29, 0
      %p109 = por %p107, %p108
      %s111 = sadd.s32 %s110, 1
      %p114 = scmp.eq.s32.totalorder %s23, 1
      %p115 = scmp.ne.s32.totalorder %s110, %s112
      %p116 = scmp.eq.s32.totalorder %s23, 0
      %p117 = por %p115, %p116
      %p118 = scmp.ne.s32.totalorder %s110, %s112
      %p119 = scmp.eq.s32.totalorder %s28, 1
      %p120 = por %p118, %p119
      %p121 = scmp.ne.s32.totalorder %s112, %s113
      %p122 = scmp.eq.s32.totalorder %s28, 0
      %p123 = por %p121, %p122
      %p124 = scmp.ne.s32.totalorder %s112, %s113
      %p125 = scmp.eq.s32.totalorder %s29, 1
      %p126 = por %p124, %p125
      %p128 = scmp.ne.s32.totalorder %s113, %s127
      %p129 = scmp.eq.s32.totalorder %s29, 0
      %p130 = por %p128, %p129
      %s131 = ssub.s32 %s30, %s49
      %s132 = ssub.s32 %s31, %s45
      %s133 = sor.u32 %s131, %s132
      %p134 = scmp.eq.s32.totalorder %s133, 0
      %s136 = sadd.s32 %s135, 1
      %s137 = scalar_select %p134, %s135, %s136
      %p140 = pneg %p134
      %p141 = scmp.eq.s32.totalorder %s23, 1
      %p142 = por %p140, %p141
      %p143 = scmp.ne.s32.totalorder %s135, %s138
      %p144 = scmp.eq.s32.totalorder %s23, 0
      %p145 = por %p143, %p144
      %p146 = scmp.ne.s32.totalorder %s135, %s138
      %p147 = scmp.eq.s32.totalorder %s28, 1
      %p148 = por %p146, %p147
      %p149 = scmp.ne.s32.totalorder %s138, %s139
      %p150 = scmp.eq.s32.totalorder %s28, 0
      %p151 = por %p149, %p150
      %p152 = scmp.ne.s32.totalorder %s138, %s139
      %p153 = scmp.eq.s32.totalorder %s29, 1
      %p154 = por %p152, %p153
      %p156 = scmp.ne.s32.totalorder %s139, %s155
      %p157 = scmp.eq.s32.totalorder %s29, 0
      %p158 = por %p156, %p157
      %s159 = ssub.s32 %s30, %s49
      %s160 = ssub.s32 %s31, %s45
      %s161 = sor.u32 %s159, %s160
      %p162 = scmp.eq.s32.totalorder %s161, 0
      %s164 = sadd.s32 %s163, 1
      %s165 = scalar_select %p162, %s163, %s164
      %p168 = pneg %p162
      %p169 = scmp.eq.s32.totalorder %s23, 1
      %p170 = por %p168, %p169
      %p171 = scmp.ne.s32.totalorder %s163, %s166
      %p172 = scmp.eq.s32.totalorder %s23, 0
      %p173 = por %p171, %p172
      %p174 = scmp.ne.s32.totalorder %s163, %s166
      %p175 = scmp.eq.s32.totalorder %s28, 1
      %p176 = por %p174, %p175
      %p177 = scmp.ne.s32.totalorder %s166, %s167
      %p178 = scmp.eq.s32.totalorder %s28, 0
      %p179 = por %p177, %p178
      %p180 = scmp.ne.s32.totalorder %s166, %s167
      %p181 = scmp.eq.s32.totalorder %s29, 1
      %p182 = por %p180, %p181
      %p184 = scmp.ne.s32.totalorder %s167, %s183
      %p185 = scmp.eq.s32.totalorder %s29, 0
      %p186 = por %p184, %p185
      %p187 = scmp.le.s32.totalorder 1, %s23
      %p188 = scmp.lt.s32.totalorder %s23, 3
      %p189 = pnand %p187, %p188
      %p190 = pneg %p189
      // Predicated region
      $region9: #{tpu_custom_call.1} parent=5 // pred_check
        _
      $region10: #{tpu_custom_call.1} parent=5 // pred_check_branch
        %192 = sbr.rel (%p189) target = $region12
      $region11: #{tpu_custom_call.1} parent=5 // pred_region
        %s193 = ssub.s32 %s23, 1
        // Predicated region
        $region13: #{tpu_custom_call.1} parent=11 // pred_check
          %p194 = pneg %p123
        $region14: #{tpu_custom_call.1} parent=11 // pred_check_branch
          %196 = sbr.rel (%p194) target = $region16
        $region15: #{tpu_custom_call.1} parent=11 // pred_region
          _
        $region16: #{tpu_custom_call.1} parent=11 // pred_fallthru
          _
      $region12: #{tpu_custom_call.1} parent=5 // pred_fallthru
        _
      %p197 = scmp.lt.s32.totalorder %s23, 2
      // Predicated region
      $region17: #{tpu_custom_call.1} parent=5 // pred_check
        %p198 = pneg %p197
      $region18: #{tpu_custom_call.1} parent=5 // pred_check_branch
        %200 = sbr.rel (%p198) target = $region20
      $region19: #{tpu_custom_call.1} parent=5 // pred_region
        // Predicated region
        $region21: #{tpu_custom_call.1} parent=19 // pred_check
          %p201 = pneg %p66
        $region22: #{tpu_custom_call.1} parent=19 // pred_check_branch
          %203 = sbr.rel (%p201) target = $region24
        $region23: #{tpu_custom_call.1} parent=19 // pred_region
          %s204 = sand.u32 %s56, 1
          %s205 = scalar_lea.sflag [#allocation4], %s204
          %s206 = sand.u32 %s56, 1
          %s207 = smul.addr %s206, 8
          %s208 = scalar_lea.vmem [#allocation3], %s207
          %s209 = sadd.s32 %s31, %s32
          %s211 = ssub.s32 128, 128
          %212 = vsyncadd %s205, %s211
          %s213 = smul.addr %s30, 4
          %s214 = sadd.s32 %s209, %s213
          %s215 = smul.addr %s214, 32
          %s216 = scalar_lea.hbm %s0, %s215
          %s217 = sshll.u32 %s208, 4
          %s218 = int_to_ptr.vmem [resolvable:$true] %s217
          %223 = dma.hbm_to_vmem [thread:$0]  %s216, 128, %s218, %s205, 32, 32, 2
        $region24: #{tpu_custom_call.1} parent=19 // pred_fallthru
          _
        // Predicated region
        $region25: #{tpu_custom_call.1} parent=19 // pred_check
          %p224 = pneg %p96
        $region26: #{tpu_custom_call.1} parent=19 // pred_check_branch
          %226 = sbr.rel (%p224) target = $region28
        $region27: #{tpu_custom_call.1} parent=19 // pred_region
          %s227 = sand.u32 %s86, 1
          %s228 = scalar_lea.sflag [#allocation7], %s227
          %s229 = sand.u32 %s86, 1
          %s230 = smul.addr %s229, 8
          %s231 = scalar_lea.vmem [#allocation6], %s230
          %s232 = sadd.s32 %s31, %s32
          %s234 = ssub.s32 128, 128
          %235 = vsyncadd %s228, %s234
          %s236 = smul.addr %s30, 4
          %s237 = sadd.s32 %s232, %s236
          %s238 = smul.addr %s237, 32
          %s239 = scalar_lea.hbm %s1, %s238
          %s240 = sshll.u32 %s231, 4
          %s241 = int_to_ptr.vmem [resolvable:$true] %s240
          %246 = dma.hbm_to_vmem [thread:$0]  %s239, 128, %s241, %s228, 32, 32, 2
        $region28: #{tpu_custom_call.1} parent=19 // pred_fallthru
          _
      $region20: #{tpu_custom_call.1} parent=5 // pred_fallthru
        _
      %p247 = scmp.le.s32.totalorder 1, %s23
      %p248 = scmp.lt.s32.totalorder %s23, 3
      %p249 = pnand %p247, %p248
      %p250 = pneg %p249
      // Predicated region
      $region29: #{tpu_custom_call.1} parent=5 // pred_check
        _
      $region30: #{tpu_custom_call.1} parent=5 // pred_check_branch
        %252 = sbr.rel (%p249) target = $region32
      $region31: #{tpu_custom_call.1} parent=5 // pred_region
        %s253 = ssub.s32 %s23, 1
        %s254 = sand.u32 %s59, 1
        %s255 = scalar_lea.sflag [#allocation4], %s254
        %s256 = sand.u32 %s59, 1
        %s257 = smul.addr %s256, 8
        %s258 = scalar_lea.vmem [#allocation3], %s257
        // Predicated region
        $region33: #{tpu_custom_call.1} parent=31 // pred_check
          %p259 = pneg %p72
        $region34: #{tpu_custom_call.1} parent=31 // pred_check_branch
          %261 = sbr.rel (%p259) target = $region36
        $region35: #{tpu_custom_call.1} parent=31 // pred_region
          %262 = dma.done %s255, 128
        $region36: #{tpu_custom_call.1} parent=31 // pred_fallthru
          _
        %s263 = sand.u32 %s89, 1
        %s264 = scalar_lea.sflag [#allocation7], %s263
        %s265 = sand.u32 %s89, 1
        %s266 = smul.addr %s265, 8
        %s267 = scalar_lea.vmem [#allocation6], %s266
        // Predicated region
        $region37: #{tpu_custom_call.1} parent=31 // pred_check
          %p268 = pneg %p102
        $region38: #{tpu_custom_call.1} parent=31 // pred_check_branch
          %270 = sbr.rel (%p268) target = $region40
        $region39: #{tpu_custom_call.1} parent=31 // pred_region
          %271 = dma.done %s264, 128
        $region40: #{tpu_custom_call.1} parent=31 // pred_fallthru
          _
        %s272 = sand.u32 %s59, 1
        %s273 = scalar_lea.sflag [#allocation4], %s272
        %s274 = sand.u32 %s59, 1
        %s275 = smul.addr %s274, 8
        %s276 = scalar_lea.vmem [#allocation3], %s275
        %p277 = pneg %p72
        %p278 = pneg %p69
        %s279 = sand.u32 %s89, 1
        %s280 = scalar_lea.sflag [#allocation7], %s279
        %s281 = sand.u32 %s89, 1
        %s282 = smul.addr %s281, 8
        %s283 = scalar_lea.vmem [#allocation6], %s282
        %p284 = pneg %p102
        %p285 = pneg %p99
        %p286 = pneg %p123
        %p287 = pneg %p120
        %p288 = pneg %p151
        %p289 = pneg %p148
        %s290 = sand.u32 %s138, 1
        %s291 = scalar_lea.sflag [#allocation5], %s290
        %s292 = sand.u32 %s138, 1
        %s293 = smul.addr %s292, 8
        %s294 = scalar_lea.vmem [#allocation8], %s293
        %p295 = pneg %p179
        %p296 = pneg %p176
        %s297 = sand.u32 %s166, 1
        %s298 = scalar_lea.sflag [#allocation10], %s297
        %s299 = sand.u32 %s166, 1
        %s300 = smul.addr %s299, 8
        %s301 = scalar_lea.vmem [#allocation9], %s300
        %s302 = sadd.s32 %s34, %s35
        %s303 = sadd.s32 %s34, %s35
        %p304 = scmp.eq.s32.totalorder %s35, 0
        // Predicated region
        $region41: #{tpu_custom_call.1} parent=31 // pred_check
          %p305 = pneg %p304
        $region42: #{tpu_custom_call.1} parent=31 // pred_check_branch
          %307 = sbr.rel (%p305) target = $region44
        $region43: #{tpu_custom_call.1} parent=31 // pred_region
          %308 = vst [vmem:[#allocation2] sm:$0xf] 0.0
          %309 = vst [vmem:[#allocation2 + $0x4] sm:$0xf] 0.0
        $region44: #{tpu_custom_call.1} parent=31 // pred_fallthru
          _
        %v310 = vld [vmem:[%s258] sm:$0x3]
        %v311 = vld [vmem:[%s258 + $0x2] sm:$0x3]
        %v312 = vld [vmem:[%s258 + $0x4] sm:$0x3]
        %v313 = vld [vmem:[%s258 + $0x6] sm:$0x3]
        %v314 = vld [vmem:[%s267] sm:$0x3]
        %v315 = vld [vmem:[%s267 + $0x2] sm:$0x3]
        %v316 = vld [vmem:[%s267 + $0x4] sm:$0x3]
        %v317 = vld [vmem:[%s267 + $0x6] sm:$0x3]
        %vm318 = vcmask 1041408
        %v319 = vsel %vm318, %v310, -inf
        %v320 = vsel %vm318, %v311, -inf
        %v321 = vsel %vm318, %v312, -inf
        %v322 = vsel %vm318, %v313, -inf
        %v323 = vmax.f32 %v319, %v320
        %v324 = vmax.f32 %v321, %v322
        %v325 = vmax.f32 %v323, %v324
        %v326 = vsub.f32 %v310, %v325
        %v327 = vsub.f32 %v311, %v325
        %v328 = vsub.f32 %v312, %v325
        %v329 = vsub.f32 %v313, %v325
        %v330 = vmul.f32 %v326, 1.442695
        %v331 = vpow.pop %v330
        %v332 = vmul.f32 %v327, 1.442695
        %v333 = vpow.pop %v332
        %v334 = vmul.f32 %v328, 1.442695
        %v335 = vpow.pop %v334
        %v336 = vmul.f32 %v329, 1.442695
        %v337 = vpow.pop %v336
        %v338 = vsel %vm318, %v331, 0.0
        %v339 = vsel %vm318, %v333, 0.0
        %v340 = vadd.f32 %v338, %v339
        %v341 = vsel %vm318, %v335, 0.0
        %v342 = vadd.f32 %v340, %v341
        %v343 = vsel %vm318, %v337, 0.0
        %v344 = vadd.f32 %v342, %v343
        %v345 = vrcp.pop %v344
        %v346 = vmul.f32 %v331, %v345
        %v347 = vmul.f32 %v333, %v345
        %v348 = vmul.f32 %v335, %v345
        %v349 = vmul.f32 %v337, %v345
        %v350 = vld [vmem:[#allocation2] sm:$0xf]
        %v351 = vmul.f32 %v346, %v314
        %v352 = vmul.f32 %v347, %v315
        %v353 = vmul.f32 %v348, %v316
        %v354 = vmul.f32 %v349, %v317
        %v355 = vsel %vm318, %v351, 0.0
        %v356 = vrot.slane %v355, 4
        %v357 = vadd.f32 %v355, %v356
        %v358 = vrot.slane %v357, 2
        %v359 = vadd.f32 %v357, %v358
        %v360 = vrot.slane %v359, 1
        %v361 = vadd.f32 %v359, %v360
        %v362 = vsel %vm318, %v352, 0.0
        %v363 = vrot.slane %v362, 4
        %v364 = vadd.f32 %v362, %v363
        %v365 = vrot.slane %v364, 2
        %v366 = vadd.f32 %v364, %v365
        %v367 = vrot.slane %v366, 1
        %v368 = vadd.f32 %v366, %v367
        %v369 = vsel %vm318, %v353, 0.0
        %v370 = vrot.slane %v369, 4
        %v371 = vadd.f32 %v369, %v370
        %v372 = vrot.slane %v371, 2
        %v373 = vadd.f32 %v371, %v372
        %v374 = vrot.slane %v373, 1
        %v375 = vadd.f32 %v373, %v374
        %v376 = vsel %vm318, %v354, 0.0
        %v377 = vrot.slane %v376, 4
        %v378 = vadd.f32 %v376, %v377
        %v379 = vrot.slane %v378, 2
        %v380 = vadd.f32 %v378, %v379
        %v381 = vrot.slane %v380, 1
        %v382 = vadd.f32 %v380, %v381
        %vm387 = vcmask 1041409
        %v388 = vsel %vm387, %v368, %v361
        %vm389 = vcmask 1042434
        %v390 = vsel %vm389, %v375, %v388
        %vm391 = vcmask 1043459
        %v392 = vsel %vm391, %v382, %v390
        %v394 = vadd.f32 %v350, %v392
        %395 = vst [vmem:[#allocation2] sm:$0xf] %v394
        %s396 = scalar_lea.vmem [#allocation2], 4
        %v397 = vld [vmem:[%s396] sm:$0xf]
        %v398 = vsel %vm318, %v314, 0.0
        %v399 = vrot.slane %v398, 4
        %v400 = vadd.f32 %v398, %v399
        %v401 = vrot.slane %v400, 2
        %v402 = vadd.f32 %v400, %v401
        %v403 = vrot.slane %v402, 1
        %v404 = vadd.f32 %v402, %v403
        %v405 = vsel %vm318, %v315, 0.0
        %v406 = vrot.slane %v405, 4
        %v407 = vadd.f32 %v405, %v406
        %v408 = vrot.slane %v407, 2
        %v409 = vadd.f32 %v407, %v408
        %v410 = vrot.slane %v409, 1
        %v411 = vadd.f32 %v409, %v410
        %v412 = vsel %vm318, %v316, 0.0
        %v413 = vrot.slane %v412, 4
        %v414 = vadd.f32 %v412, %v413
        %v415 = vrot.slane %v414, 2
        %v416 = vadd.f32 %v414, %v415
        %v417 = vrot.slane %v416, 1
        %v418 = vadd.f32 %v416, %v417
        %v419 = vsel %vm318, %v317, 0.0
        %v420 = vrot.slane %v419, 4
        %v421 = vadd.f32 %v419, %v420
        %v422 = vrot.slane %v421, 2
        %v423 = vadd.f32 %v421, %v422
        %v424 = vrot.slane %v423, 1
        %v425 = vadd.f32 %v423, %v424
        %v430 = vsel %vm387, %v411, %v404
        %v431 = vsel %vm389, %v418, %v430
        %v432 = vsel %vm391, %v425, %v431
        %v434 = vadd.f32 %v397, %v432
        %435 = vst [vmem:[%s396] sm:$0xf] %v434
        // Predicated region
        $region45: #{tpu_custom_call.1} parent=31 // pred_check
          %p436 = pneg %p304
        $region46: #{tpu_custom_call.1} parent=31 // pred_check_branch
          %438 = sbr.rel (%p436) target = $region48
        $region47: #{tpu_custom_call.1} parent=31 // pred_region
          %v439 = vld [vmem:[%s2] sm:$0xf]
          %v440 = vld [vmem:[#allocation2] sm:$0xf]
          %442 = vset.pattern.permute.xlu0 0
          %443 = vperm.xlu0 %442, %v439
          %v444 = vpop.permute.xlu0 %443
          %v446 = vmul.f32 %v440, %v444
          %vm447 = vcmask 1043456
          %v448 = vsel %vm447, %v446, 0.0
          %449 = vadd.xlane.f32.xlu0 %v448
          %v450 = vpop.xlane.xlu0 %449
          %v451 = vrot.slane %v450, 4
          %v452 = vadd.f32 %v450, %v451
          %v453 = vrot.slane %v452, 2
          %v454 = vadd.f32 %v452, %v453
          %v455 = vrot.slane %v454, 1
          %v456 = vadd.f32 %v454, %v455
          %s457 = vtos %v456
          %v458 = vstv %s457
          %459 = vst [vmem:[%s294] sm:$0xff] %v458
          %v460 = vld [vmem:[%s396] sm:$0xf]
          %v461 = vmul.f32 %v460, %v444
          %v462 = vsel %vm447, %v461, 0.0
          %463 = vadd.xlane.f32.xlu0 %v462
          %v464 = vpop.xlane.xlu0 %463
          %v465 = vrot.slane %v464, 4
          %v466 = vadd.f32 %v464, %v465
          %v467 = vrot.slane %v466, 2
          %v468 = vadd.f32 %v466, %v467
          %v469 = vrot.slane %v468, 1
          %v470 = vadd.f32 %v468, %v469
          %s471 = vtos %v470
          %v472 = vstv %s471
          %473 = vst [vmem:[%s301] sm:$0xff] %v472
        $region48: #{tpu_custom_call.1} parent=31 // pred_fallthru
          _
        %s474 = sand.u32 %s138, 1
        %s475 = scalar_lea.sflag [#allocation5], %s474
        %s476 = sand.u32 %s138, 1
        %s477 = smul.addr %s476, 8
        %s478 = scalar_lea.vmem [#allocation8], %s477
        %s479 = sand.u32 %s166, 1
        %s480 = scalar_lea.sflag [#allocation10], %s479
        %s481 = sand.u32 %s166, 1
        %s482 = smul.addr %s481, 8
        %s483 = scalar_lea.vmem [#allocation9], %s482
        // Predicated region
        $region49: #{tpu_custom_call.1} parent=31 // pred_check
          %p484 = pneg %p148
        $region50: #{tpu_custom_call.1} parent=31 // pred_check_branch
          %486 = sbr.rel (%p484) target = $region52
        $region51: #{tpu_custom_call.1} parent=31 // pred_region
          %s488 = ssub.s32 128, 128
          %489 = vsyncadd %s475, %s488
          %s490 = sadd.s32 %s34, %s33
          %s491 = smul.addr %s490, 128
          %s492 = scalar_lea.hbm %s3, %s491
          %s494 = sshll.u32 %s478, 4
          %s495 = int_to_ptr.vmem [resolvable:$true] %s494
          %497 = dma.vmem_to_hbm [thread:$0]  %s495, 128, %s492, %s475
        $region52: #{tpu_custom_call.1} parent=31 // pred_fallthru
          _
        // Predicated region
        $region53: #{tpu_custom_call.1} parent=31 // pred_check
          %p498 = pneg %p176
        $region54: #{tpu_custom_call.1} parent=31 // pred_check_branch
          %500 = sbr.rel (%p498) target = $region56
        $region55: #{tpu_custom_call.1} parent=31 // pred_region
          %s502 = ssub.s32 128, 128
          %503 = vsyncadd %s480, %s502
          %s504 = sadd.s32 %s34, %s33
          %s505 = smul.addr %s504, 128
          %s506 = scalar_lea.hbm %s4, %s505
          %s508 = sshll.u32 %s483, 4
          %s509 = int_to_ptr.vmem [resolvable:$true] %s508
          %511 = dma.vmem_to_hbm [thread:$0]  %s509, 128, %s506, %s480
        $region56: #{tpu_custom_call.1} parent=31 // pred_fallthru
          _
      $region32: #{tpu_custom_call.1} parent=5 // pred_fallthru
        _
      %p512 = scmp.le.s32.totalorder 2, %s23
      // Predicated region
      $region57: #{tpu_custom_call.1} parent=5 // pred_check
        %p513 = pneg %p512
      $region58: #{tpu_custom_call.1} parent=5 // pred_check_branch
        %515 = sbr.rel (%p513) target = $region60
      $region59: #{tpu_custom_call.1} parent=5 // pred_region
        %s516 = ssub.s32 %s23, 2
        // Predicated region
        $region61: #{tpu_custom_call.1} parent=59 // pred_check
          %p517 = pneg %p154
        $region62: #{tpu_custom_call.1} parent=59 // pred_check_branch
          %519 = sbr.rel (%p517) target = $region64
        $region63: #{tpu_custom_call.1} parent=59 // pred_region
          %s520 = sand.u32 %s139, 1
          %s521 = scalar_lea.sflag [#allocation5], %s520
          %s522 = sand.u32 %s139, 1
          %s523 = smul.addr %s522, 8
          %s524 = scalar_lea.vmem [#allocation8], %s523
          %525 = dma.done %s521, 128
        $region64: #{tpu_custom_call.1} parent=59 // pred_fallthru
          _
        // Predicated region
        $region65: #{tpu_custom_call.1} parent=59 // pred_check
          %p526 = pneg %p182
        $region66: #{tpu_custom_call.1} parent=59 // pred_check_branch
          %528 = sbr.rel (%p526) target = $region68
        $region67: #{tpu_custom_call.1} parent=59 // pred_region
          %s529 = sand.u32 %s167, 1
          %s530 = scalar_lea.sflag [#allocation10], %s529
          %s531 = sand.u32 %s167, 1
          %s532 = smul.addr %s531, 8
          %s533 = scalar_lea.vmem [#allocation9], %s532
          %534 = dma.done %s530, 128
        $region68: #{tpu_custom_call.1} parent=59 // pred_fallthru
          _
      $region60: #{tpu_custom_call.1} parent=5 // pred_fallthru
        _
    $region6: #{tpu_custom_call.1} parent=1 // loop_footer
      %s27 = sadd.s32 1, %s23
    $region7: #{tpu_custom_call.1} parent=1 // loop_footer_branch
      %22 = sbr.rel target = $region3
    $region8: #{tpu_custom_call.1} parent=1 // loop_exit
      _
    %535 = vsyncpa [#allocation4], 1
    %s536 = scalar_lea.sflag [#allocation4], 1
    %537 = vsyncpa %s536, 1
    %538 = vsyncpa [#allocation7], 1
    %s539 = scalar_lea.sflag [#allocation7], 1
    %540 = vsyncpa %s539, 1
    %541 = vsyncpa [#allocation5], 1
    %s542 = scalar_lea.sflag [#allocation5], 1
    %543 = vsyncpa %s542, 1
    %544 = vsyncpa [#allocation10], 1
    %s545 = scalar_lea.sflag [#allocation10], 1
    %546 = vsyncpa %s545, 1

</llo_original>
